<compile_context>
chip_gen: v7x
topology: tpu7x:2x2x1
jax: 0.10.0
libtpu: 0.0.40
codegen_flags: <defaults>
</compile_context>

<pallas_src>
import functools

import jax
import jax.numpy as jnp
import numpy as np
from jax.experimental import pallas as pl
from jax.experimental.pallas import tpu as pltpu

EPS = 1e-6
FACTOR = 4.0


# --------------------------------------------------------------------------
# Tiling helpers
# --------------------------------------------------------------------------
def _round_up(n, m):
    return -(-n // m) * m


@functools.lru_cache(maxsize=None)
def _vmem_budget():
    """(vmem_limit_bytes, target_block_bytes) tuned per TPU generation."""
    try:
        cap = int(pltpu.get_tpu_info().vmem_capacity_bytes)
    except Exception:                       # conservative default (v7x-sized)
        cap = 64 << 20
    if cap >= (128 << 20):                  # v5e / v6e: 128 MiB VMEM
        return 64 << 20, 8 << 20
    return 48 << 20, 6 << 20                # v7x: 64 MiB physical VMEM


def _legal_channel_tiles(C):
    """Channel tiles keeping (.., tc, ..) sublane-axis blocks layout-legal:
    multiples of 8 dividing C, plus C itself (full-dim block is always legal)."""
    return sorted({C, *[d for d in range(8, C, 8) if C % d == 0]})


def _pick_fused_tc(B, C, HW, target_bytes, min_steps=4):
    """Largest channel tile whose (B, tc, HW) f32 slab (with lane/sublane
    padding) fits the block target; shrink a bit if that would leave a
    multi-TensorCore chip with fewer than min_steps grid steps."""
    hw_pad = _round_up(HW, 128)

    def blk(tc):
        return B * _round_up(tc, 8) * hw_pad * 4       # f32 working copy

    tiles = [t for t in _legal_channel_tiles(C) if blk(t) <= target_bytes]
    if not tiles:
        return None
    best = tiles[-1]
    if C // best < min_steps:
        for t in tiles:                                  # keep largest tc with
            if C // t >= min_steps and blk(t) >= (1 << 20):   # >= min_steps
                best = t
    return best


def _pick_two_pass_tiles(B, C, HW, target_bytes, min_steps=4):
    """(tc, th) for the two-pass fallback with (1, tc, th) x-blocks."""
    hw_pad = _round_up(HW, 128)

    def blk(tc, th_pad):
        return _round_up(tc, 8) * th_pad * 4

    tiles = _legal_channel_tiles(C)
    fitting = [t for t in tiles if blk(t, hw_pad) <= target_bytes]
    if fitting:
        tc = fitting[-1]
        if B * (C // tc) < min_steps:
            for t in fitting:
                if B * (C // t) >= min_steps and blk(t, hw_pad) >= (1 << 20):
                    tc = t
        return tc, HW
    # Even the smallest channel tile is too big: split the HW (lane) axis.
    tc = tiles[0]
    th = HW
    if HW % 128 == 0:
        for t in range(128, HW, 128):
            if HW % t == 0 and blk(tc, t) <= target_bytes:
                th = t                                   # largest fitting split
    # If HW has no 128-multiple divisor we keep th == HW and rely on the vmem
    # limit; truly pathological shapes may still be forced to serialize.
    return tc, th


# --------------------------------------------------------------------------
# Fused single-pass kernel: stats + reparameterize + normalize (2x HBM traffic)
# --------------------------------------------------------------------------
def _fused_kernel(x_ref, nmu_ref, nstd_ref, o_ref, *, hw):
    # x_ref: (B, tc, HW);  nmu/nstd: (B, tc, 1) f32 Gaussian noise.
    x = x_ref[...].astype(jnp.float32)
    b = x.shape[0]

    mean = jnp.mean(x, axis=-1, keepdims=True)                      # (B, tc, 1)
    d = x - mean
    var = jnp.sum(d * d, axis=-1, keepdims=True) * (1.0 / max(hw - 1, 1))
    std = jnp.sqrt(var + EPS)                                       # (B, tc, 1)

    if b > 1:                       # cross-batch sqrt-variance of the stats
        mu_c = jnp.mean(mean, axis=0, keepdims=True)
        sv_mu = jnp.sqrt(jnp.sum((mean - mu_c) ** 2, axis=0, keepdims=True)
                         * (1.0 / (b - 1)) + EPS)
        sd_c = jnp.mean(std, axis=0, keepdims=True)
        sv_sd = jnp.sqrt(jnp.sum((std - sd_c) ** 2, axis=0, keepdims=True)
                         * (1.0 / (b - 1)) + EPS)
    else:                           # guard: torch would produce NaN here
        sv_mu = jnp.full_like(mean, EPS ** 0.5)
        sv_sd = jnp.full_like(std, EPS ** 0.5)

    beta = mean + nmu_ref[...] * (FACTOR * sv_mu)
    gamma = std + nstd_ref[...] * (FACTOR * sv_sd)
    # (x - mean)/std * gamma + beta  ==  x*scale + shift  (pure FMA on x)
    scale = gamma / std
    shift = beta - mean * scale
    o_ref[...] = (x * scale + shift).astype(o_ref.dtype)


def _dsu_fused(x3, nmu, nstd, tc, vmem_limit):
    B, C, HW = x3.shape
    vec_spec = pl.BlockSpec((B, tc, 1), lambda c: (0, c, 0))
    return pl.pallas_call(
        functools.partial(_fused_kernel, hw=HW),
        out_shape=jax.ShapeDtypeStruct((B, C, HW), x3.dtype),
        grid=(C // tc,),
        in_specs=[pl.BlockSpec((B, tc, HW), lambda c: (0, c, 0)),
                  vec_spec, vec_spec],
        out_specs=pl.BlockSpec((B, tc, HW), lambda c: (0, c, 0)),
        compiler_params=pltpu.CompilerParams(
            dimension_semantics=("parallel",),
            vmem_limit_bytes=vmem_limit),
    )(x3, nmu, nstd)


# --------------------------------------------------------------------------
# Two-pass fallback: per-(b,c) stats kernel + folded FMA normalize kernel
# --------------------------------------------------------------------------
def _stats_kernel(x_ref, mean_ref, std_ref, s_acc, sq_acc, *, hw, centered):
    x = x_ref[...].astype(jnp.float32)
    inv_nm1 = 1.0 / max(hw - 1, 1)
    if centered:
        # Full row resident in VMEM: numerically stable two-pass variance.
        m = jnp.mean(x, axis=-1, keepdims=True)
        d = x - m
        var = jnp.sum(d * d, axis=-1, keepdims=True) * inv_nm1
        mean_ref[...] = m
        std_ref[...] = jnp.sqrt(var + EPS)
    else:
        # HW split across the last ("arbitrary") grid axis: accumulate partial
        # sums in f32 VMEM scratch, finalize on the last chunk.
        h = pl.program_id(2)

        @pl.when(h == 0)
        def _():
            s_acc[...] = jnp.zeros_like(s_acc)
            sq_acc[...] = jnp.zeros_like(sq_acc)

        s_acc[...] += jnp.sum(x, axis=-1, keepdims=True)
        sq_acc[...] += jnp.sum(x * x, axis=-1, keepdims=True)

        @pl.when(h == pl.num_programs(2) - 1)
        def _():
            m = s_acc[...] * (1.0 / hw)
            var = jnp.maximum((sq_acc[...] - hw * m * m) * inv_nm1, 0.0)
            mean_ref[...] = m
            std_ref[...] = jnp.sqrt(var + EPS)


def _norm_kernel(x_ref, scale_ref, shift_ref, o_ref):
    x = x_ref[...].astype(jnp.float32)
    o_ref[...] = (x * scale_ref[...] + shift_ref[...]).astype(o_ref.dtype)


def _compute_stats(x3, tc, th, vmem_limit):
    B, C, HW = x3.shape
    nh = HW // th
    stat = jax.ShapeDtypeStruct((B, C, 1), jnp.float32)
    vec_spec = pl.BlockSpec((1, tc, 1), lambda b, c, h: (b, c, 0))
    return pl.pallas_call(
        functools.partial(_stats_kernel, hw=HW, centered=(nh == 1)),
        out_shape=(stat, stat),
        grid=(B, C // tc, nh),
        in_specs=[pl.BlockSpec((1, tc, th), lambda b, c, h: (b, c, h))],
        out_specs=(vec_spec, vec_spec),
        scratch_shapes=[pltpu.VMEM((1, tc, 1), jnp.float32),
                        pltpu.VMEM((1, tc, 1), jnp.float32)],
        compiler_params=pltpu.CompilerParams(
            dimension_semantics=("parallel", "parallel", "arbitrary"),
            vmem_limit_bytes=vmem_limit),
    )(x3)


def _normalize(x3, scale, shift, tc, th, vmem_limit):
    B, C, HW = x3.shape
    vec_spec = pl.BlockSpec((1, tc, 1), lambda b, c, h: (b, c, 0))
    return pl.pallas_call(
        _norm_kernel,
        out_shape=jax.ShapeDtypeStruct((B, C, HW), x3.dtype),
        grid=(B, C // tc, HW // th),
        in_specs=[pl.BlockSpec((1, tc, th), lambda b, c, h: (b, c, h)),
                  vec_spec, vec_spec],
        out_specs=pl.BlockSpec((1, tc, th), lambda b, c, h: (b, c, h)),
        compiler_params=pltpu.CompilerParams(
            dimension_semantics=("parallel", "parallel", "parallel"),
            vmem_limit_bytes=vmem_limit),
    )(x3, scale, shift)


# --------------------------------------------------------------------------
# Public forward
# --------------------------------------------------------------------------
@functools.partial(jax.jit,
                   static_argnames=("p", "training", "force_two_pass",
                                    "max_block_bytes"))
def dsu_forward(x, key, p=0.5, training=True, force_two_pass=False,
                max_block_bytes=None):
    """DSU forward pass (training semantics of the PyTorch module).

    x:   (B, C, H, W) NCHW feature map.
    key: jax PRNG key supplying the stochastic gate and the Gaussian
         reparameterization noise (torch uses np.random / torch.randn).
    """
    if not training:
        return x

    B, C, H, W = x.shape
    HW = H * W
    vmem_limit, target = _vmem_budget()
    if max_block_bytes is not None:
        target = max_block_bytes

    gate_key, k_mu, k_std = jax.random.split(key, 3)
    apply_gate = jax.random.uniform(gate_key) <= p      # apply with prob p

    fused_tc = None if force_two_pass else _pick_fused_tc(B, C, HW, target)

    def _apply(x):
        x3 = x.reshape(B, C, HW)                        # lane-dense layout
        nmu = jax.random.normal(k_mu, (B, C, 1), jnp.float32)
        nstd = jax.random.normal(k_std, (B, C, 1), jnp.float32)

        if fused_tc is not None:
            # Single pass over x: read + write only.
            out3 = _dsu_fused(x3, nmu, nstd, fused_tc, vmem_limit)
        else:
            # Two-pass fallback when the full (B, tc, HW) slab can't fit VMEM.
            tc, th = _pick_two_pass_tiles(B, C, HW, target)
            mean, std = _compute_stats(x3, tc, th, vmem_limit)   # (B, C, 1)
            if B > 1:
                sv_mu = jnp.sqrt(jnp.var(mean, axis=0, ddof=1, keepdims=True) + EPS)
                sv_sd = jnp.sqrt(jnp.var(std, axis=0, ddof=1, keepdims=True) + EPS)
            else:                                        # NaN guard (B == 1)
                sv_mu = jnp.full_like(mean, EPS ** 0.5)
                sv_sd = jnp.full_like(std, EPS ** 0.5)
            beta = mean + nmu * FACTOR * sv_mu
            gamma = std + nstd * FACTOR * sv_sd
            scale = gamma / std                          # fold into one FMA
            shift = beta - mean * scale
            out3 = _normalize(x3, scale, shift, tc, th, vmem_limit)
        return out3.reshape(B, C, H, W)

    return jax.lax.cond(apply_gate, _apply, lambda y: y, x)


# --------------------------------------------------------------------------
# Pure-jnp reference (mirrors the PyTorch module, same key usage)
# --------------------------------------------------------------------------
def _dsu_reference(x, key, p=0.5):
    B, C, H, W = x.shape
    gate_key, k_mu, k_std = jax.random.split(key, 3)
    apply_gate = jax.random.uniform(gate_key) <= p
    xf = x.astype(jnp.float32)
    mean = jnp.mean(xf, axis=(2, 3))
    std = jnp.sqrt(jnp.var(xf, axis=(2, 3), ddof=1) + EPS)
    if B > 1:
        sv_mu = jnp.sqrt(jnp.var(mean, axis=0, ddof=1, keepdims=True) + EPS)
        sv_sd = jnp.sqrt(jnp.var(std, axis=0, ddof=1, keepdims=True) + EPS)
    else:
        sv_mu = jnp.full((1, C), EPS ** 0.5, jnp.float32)
        sv_sd = jnp.full((1, C), EPS ** 0.5, jnp.float32)
    nmu = jax.random.normal(k_mu, (B, C, 1), jnp.float32)[..., 0]
    nsd = jax.random.normal(k_std, (B, C, 1), jnp.float32)[..., 0]
    beta = mean + nmu * FACTOR * sv_mu
    gamma = std + nsd * FACTOR * sv_sd
    y = (xf - mean[:, :, None, None]) / std[:, :, None, None]
    y = (y * gamma[:, :, None, None] + beta[:, :, None, None]).astype(x.dtype)
    return jnp.where(apply_gate, y, x)


if __name__ == "__main__":
    key = jax.random.PRNGKey(0)
    kx, kf = jax.random.split(key)
    x = jax.random.normal(kx, (2, 4, 16, 16), dtype=jnp.float32)

    ref = jax.block_until_ready(_dsu_reference(x, kf, p=1.0))

    # 1) fused single-pass path (default)
    out = jax.block_until_ready(dsu_forward(x, kf, p=1.0, training=True))
    assert out.shape == x.shape and out.dtype == x.dtype
    assert bool(jnp.all(jnp.isfinite(out)))
    np.testing.assert_allclose(np.asarray(out), np.asarray(ref),
                               rtol=1e-4, atol=1e-4)

    # 2) two-pass fallback (channel-tiled stats + folded-FMA normalize)
    out2 = jax.block_until_ready(
        dsu_forward(x, kf, p=1.0, training=True, force_two_pass=True))
    np.testing.assert_allclose(np.asarray(out2), np.asarray(ref),
                               rtol=1e-4, atol=1e-4)

    # 3) two-pass fallback with a forced HW-split grid axis (tiny block target
    #    exercises the scratch-accumulating stats kernel)
    out3 = jax.block_until_ready(
        dsu_forward(x, kf, p=1.0, training=True, force_two_pass=True,
                    max_block_bytes=4096))
    np.testing.assert_allclose(np.asarray(out3), np.asarray(ref),
                               rtol=1e-4, atol=1e-4)

    # eval mode / gate-off path is the identity
    assert bool(jnp.all(dsu_forward(x, kf, p=0.5, training=False) == x))

    print("KERNEL_OK")
</pallas_src>

<mosaic_0001>
module attributes {stable_mosaic.version = 11 : i64} {
  func.func @_fused_kernel(%arg0: i32, %arg1: memref<2x4x256xf32, #tpu.memory_space<vmem>>, %arg2: memref<2x4x1xf32, #tpu.memory_space<vmem>>, %arg3: memref<2x4x1xf32, #tpu.memory_space<vmem>>, %arg4: memref<2x4x256xf32, #tpu.memory_space<vmem>>) attributes {dimension_semantics = [#tpu.dimension_semantics<parallel>], iteration_bounds = array<i64: 1>, scalar_prefetch = 0 : i64, scratch_operands = 0 : i64, tpu.core_type = #tpu.core_type<tc>, window_params = [{transform_indices = @transform_0, window_bounds = array<i64: 2, 4, 256>}, {transform_indices = @transform_1, window_bounds = array<i64: 2, 4, 1>}, {transform_indices = @transform_2, window_bounds = array<i64: 2, 4, 1>}, {transform_indices = @transform_3, window_bounds = array<i64: 2, 4, 256>}]} {
    %c0 = arith.constant 0 : index
    %c0_0 = arith.constant 0 : index
    %c0_1 = arith.constant 0 : index
    %0 = vector.load %arg1[%c0, %c0_0, %c0_1] : memref<2x4x256xf32, #tpu.memory_space<vmem>>, vector<2x4x256xf32>
    %cst = arith.constant dense<0.000000e+00> : vector<2x4xf32>
    %1 = vector.multi_reduction <add>, %0, %cst [2] : vector<2x4x256xf32> to vector<2x4xf32>
    %2 = vector.shape_cast %1 : vector<2x4xf32> to vector<2x4x1xf32>
    %cst_2 = arith.constant 2.560000e+02 : f32
    %3 = vector.broadcast %cst_2 : f32 to vector<2x4x1xf32>
    %4 = arith.divf %2, %3 : vector<2x4x1xf32>
    %5 = vector.broadcast %4 : vector<2x4x1xf32> to vector<2x4x256xf32>
    %6 = arith.subf %0, %5 : vector<2x4x256xf32>
    %7 = arith.mulf %6, %6 : vector<2x4x256xf32>
    %cst_3 = arith.constant dense<0.000000e+00> : vector<2x4xf32>
    %8 = vector.multi_reduction <add>, %7, %cst_3 [2] : vector<2x4x256xf32> to vector<2x4xf32>
    %9 = vector.shape_cast %8 : vector<2x4xf32> to vector<2x4x1xf32>
    %cst_4 = arith.constant 0.00392156886 : f32
    %10 = vector.broadcast %cst_4 : f32 to vector<2x4x1xf32>
    %11 = arith.mulf %9, %10 : vector<2x4x1xf32>
    %cst_5 = arith.constant 9.99999997E-7 : f32
    %12 = vector.broadcast %cst_5 : f32 to vector<2x4x1xf32>
    %13 = arith.addf %11, %12 : vector<2x4x1xf32>
    %14 = math.sqrt %13 : vector<2x4x1xf32>
    %cst_6 = arith.constant dense<0.000000e+00> : vector<4x1xf32>
    %15 = vector.multi_reduction <add>, %4, %cst_6 [0] : vector<2x4x1xf32> to vector<4x1xf32>
    %16 = vector.shape_cast %15 : vector<4x1xf32> to vector<1x4x1xf32>
    %cst_7 = arith.constant 2.000000e+00 : f32
    %17 = vector.broadcast %cst_7 : f32 to vector<1x4x1xf32>
    %18 = arith.divf %16, %17 : vector<1x4x1xf32>
    %19 = vector.broadcast %18 : vector<1x4x1xf32> to vector<2x4x1xf32>
    %20 = arith.subf %4, %19 : vector<2x4x1xf32>
    %21 = arith.mulf %20, %20 : vector<2x4x1xf32>
    %cst_8 = arith.constant dense<0.000000e+00> : vector<4x1xf32>
    %22 = vector.multi_reduction <add>, %21, %cst_8 [0] : vector<2x4x1xf32> to vector<4x1xf32>
    %23 = vector.shape_cast %22 : vector<4x1xf32> to vector<1x4x1xf32>
    %cst_9 = arith.constant 1.000000e+00 : f32
    %24 = vector.broadcast %cst_9 : f32 to vector<1x4x1xf32>
    %25 = arith.mulf %23, %24 : vector<1x4x1xf32>
    %cst_10 = arith.constant 9.99999997E-7 : f32
    %26 = vector.broadcast %cst_10 : f32 to vector<1x4x1xf32>
    %27 = arith.addf %25, %26 : vector<1x4x1xf32>
    %28 = math.sqrt %27 : vector<1x4x1xf32>
    %cst_11 = arith.constant dense<0.000000e+00> : vector<4x1xf32>
    %29 = vector.multi_reduction <add>, %14, %cst_11 [0] : vector<2x4x1xf32> to vector<4x1xf32>
    %30 = vector.shape_cast %29 : vector<4x1xf32> to vector<1x4x1xf32>
    %cst_12 = arith.constant 2.000000e+00 : f32
    %31 = vector.broadcast %cst_12 : f32 to vector<1x4x1xf32>
    %32 = arith.divf %30, %31 : vector<1x4x1xf32>
    %33 = vector.broadcast %32 : vector<1x4x1xf32> to vector<2x4x1xf32>
    %34 = arith.subf %14, %33 : vector<2x4x1xf32>
    %35 = arith.mulf %34, %34 : vector<2x4x1xf32>
    %cst_13 = arith.constant dense<0.000000e+00> : vector<4x1xf32>
    %36 = vector.multi_reduction <add>, %35, %cst_13 [0] : vector<2x4x1xf32> to vector<4x1xf32>
    %37 = vector.shape_cast %36 : vector<4x1xf32> to vector<1x4x1xf32>
    %cst_14 = arith.constant 1.000000e+00 : f32
    %38 = vector.broadcast %cst_14 : f32 to vector<1x4x1xf32>
    %39 = arith.mulf %37, %38 : vector<1x4x1xf32>
    %cst_15 = arith.constant 9.99999997E-7 : f32
    %40 = vector.broadcast %cst_15 : f32 to vector<1x4x1xf32>
    %41 = arith.addf %39, %40 : vector<1x4x1xf32>
    %42 = math.sqrt %41 : vector<1x4x1xf32>
    %c0_16 = arith.constant 0 : index
    %c0_17 = arith.constant 0 : index
    %c0_18 = arith.constant 0 : index
    %43 = vector.load %arg2[%c0_16, %c0_17, %c0_18] : memref<2x4x1xf32, #tpu.memory_space<vmem>>, vector<2x4x1xf32>
    %cst_19 = arith.constant 4.000000e+00 : f32
    %44 = vector.broadcast %cst_19 : f32 to vector<1x4x1xf32>
    %45 = arith.mulf %44, %28 : vector<1x4x1xf32>
    %46 = vector.broadcast %45 : vector<1x4x1xf32> to vector<2x4x1xf32>
    %47 = arith.mulf %43, %46 : vector<2x4x1xf32>
    %48 = arith.addf %4, %47 : vector<2x4x1xf32>
    %c0_20 = arith.constant 0 : index
    %c0_21 = arith.constant 0 : index
    %c0_22 = arith.constant 0 : index
    %49 = vector.load %arg3[%c0_20, %c0_21, %c0_22] : memref<2x4x1xf32, #tpu.memory_space<vmem>>, vector<2x4x1xf32>
    %cst_23 = arith.constant 4.000000e+00 : f32
    %50 = vector.broadcast %cst_23 : f32 to vector<1x4x1xf32>
    %51 = arith.mulf %50, %42 : vector<1x4x1xf32>
    %52 = vector.broadcast %51 : vector<1x4x1xf32> to vector<2x4x1xf32>
    %53 = arith.mulf %49, %52 : vector<2x4x1xf32>
    %54 = arith.addf %14, %53 : vector<2x4x1xf32>
    %55 = arith.divf %54, %14 : vector<2x4x1xf32>
    %56 = arith.mulf %4, %55 : vector<2x4x1xf32>
    %57 = arith.subf %48, %56 : vector<2x4x1xf32>
    %58 = vector.broadcast %55 : vector<2x4x1xf32> to vector<2x4x256xf32>
    %59 = arith.mulf %0, %58 : vector<2x4x256xf32>
    %60 = vector.broadcast %57 : vector<2x4x1xf32> to vector<2x4x256xf32>
    %61 = arith.addf %59, %60 : vector<2x4x256xf32>
    %c0_24 = arith.constant 0 : index
    %c0_25 = arith.constant 0 : index
    %c0_26 = arith.constant 0 : index
    %62 = vector.load %arg4[%c0_24, %c0_25, %c0_26] : memref<2x4x256xf32, #tpu.memory_space<vmem>>, vector<2x4x256xf32>
    tpu.vector_store %arg4[%c0_24, %c0_25, %c0_26], %61 {strides = array<i32>} : memref<2x4x256xf32, #tpu.memory_space<vmem>>, vector<2x4x256xf32>,
    return
  }
  func.func @transform_0(%arg0: i32) -> (i32, i32, i32) {
    %c0_i32 = arith.constant 0 : i32
    %c0_i32_0 = arith.constant 0 : i32
    %c0_i32_1 = arith.constant 0 : i32
    return %c0_i32, %arg0, %c0_i32_0 : i32, i32, i32
  }
  func.func @transform_1(%arg0: i32) -> (i32, i32, i32) {
    %c0_i32 = arith.constant 0 : i32
    %c0_i32_0 = arith.constant 0 : i32
    %c0_i32_1 = arith.constant 0 : i32
    return %c0_i32, %arg0, %c0_i32_0 : i32, i32, i32
  }
  func.func @transform_2(%arg0: i32) -> (i32, i32, i32) {
    %c0_i32 = arith.constant 0 : i32
    %c0_i32_0 = arith.constant 0 : i32
    %c0_i32_1 = arith.constant 0 : i32
    return %c0_i32, %arg0, %c0_i32_0 : i32, i32, i32
  }
  func.func @transform_3(%arg0: i32) -> (i32, i32, i32) {
    %c0_i32 = arith.constant 0 : i32
    %c0_i32_0 = arith.constant 0 : i32
    %c0_i32_1 = arith.constant 0 : i32
    return %c0_i32, %arg0, %c0_i32_0 : i32, i32, i32
  }
}

</mosaic_0001>

<llo_original>
// kernel: branch_1_fun.1
$region0: #{branch_1_fun.1}
  #allocation0 [shape = 'u32[]', space=smem, size = 0x4, offset = 0x4, fixed_abs, tag = 'smem constant byte address 0x4 - core index']
  #allocation1 [shape = 'u32[144,128]{1,0:T(1,128)}', space=vmem, size = 0x12000, scoped, tag = 'internal scratch']
  %s0 = inlined_call_operand.vmem [shape: f32[2,4,256], index: 0, kind: input, shape index: {}]
  %s1 = inlined_call_operand.vmem [shape: f32[2,4,1], index: 1, kind: input, shape index: {}]
  %s2 = inlined_call_operand.vmem [shape: f32[2,4,1], index: 2, kind: input, shape index: {}]
  %s3 = inlined_call_operand.vmem [shape: f32[2,4,256], index: 3, kind: output, shape index: {}]
  %s4 = sld [smem:[#allocation0]]
  $region22: #{branch_1_fun.1} parent=0
    _
  %s6 = ssub.s32 1, %s4
  %s7 = scalar_select 0, %s6, %s4
  // Predicated region
  $region2: #{branch_1_fun.1} parent=0 // pred_check
    _
  $region3: #{branch_1_fun.1} parent=0 // pred_check_branch
    %9 = sbr.rel (0) target = $region5
  $region4: #{branch_1_fun.1} parent=0 // pred_region
    _
  $region5: #{branch_1_fun.1} parent=0 // pred_fallthru
    _
  // Predicated region
  $region6: #{branch_1_fun.1} parent=0 // pred_check
    _
  $region7: #{branch_1_fun.1} parent=0 // pred_check_branch
    %11 = sbr.rel (0) target = $region9
  $region8: #{branch_1_fun.1} parent=0 // pred_region
    _
  $region9: #{branch_1_fun.1} parent=0 // pred_fallthru
    _
  // Predicated region
  $region10: #{branch_1_fun.1} parent=0 // pred_check
    _
  $region11: #{branch_1_fun.1} parent=0 // pred_check_branch
    %13 = sbr.rel (0) target = $region13
  $region12: #{branch_1_fun.1} parent=0 // pred_region
    _
  $region13: #{branch_1_fun.1} parent=0 // pred_fallthru
    _
  %v14 = vld [vmem:[%s0] sm:$0xff]
  %v15 = vld [vmem:[%s0 + $0x8] sm:$0xff]
  %v18 = vcombine.high %v14, %v14
  %v19 = vcombine.high %v15, %v15
  %vm22 = vcmask 1043456
  %v23 = vsel %vm22, %v14, 0.0
  %v24 = vsel %vm22, %v18, 0.0
  %v25 = vadd.f32 %v23, %v24
  %26 = vadd.xlane.f32.xlu0 %v25
  %v27 = vpop.xlane.xlu0 %26
  %v28 = vsel %vm22, %v15, 0.0
  %v29 = vsel %vm22, %v19, 0.0
  %v30 = vadd.f32 %v28, %v29
  %31 = vadd.xlane.f32.xlu0 %v30
  %v32 = vpop.xlane.xlu0 %31
  %v33 = vrcp.pop 256.0
  %v34 = vmul.f32 %v27, %v33
  %v35 = vmul.f32 %v32, %v33
  %v39 = vunpack.c.l.s4 839922192
  %v40 = vunpack.c.0.s8 %v39
  %v41 = vlaneseq
  %v42 = vshrl.u32 %v41, 7
  %v43 = vsub.s32 %v40, %v42
  %v44 = vrot.slane %v34, %v43
  %v46 = vunpack.c.l.s4 839922192
  %v47 = vunpack.c.0.s8 %v46
  %v48 = vlaneseq
  %v49 = vshrl.u32 %v48, 7
  %v50 = vsub.s32 %v47, %v49
  %v51 = vrot.slane %v35, %v50
  %v54 = vsub.f32 %v14, %v44
  %v55 = vsub.f32 %v15, %v51
  %v56 = vmul.f32 %v54, %v54
  %v57 = vmul.f32 %v55, %v55
  %v60 = vcombine.high %v56, %v56
  %v61 = vcombine.high %v57, %v57
  %v64 = vsel %vm22, %v56, 0.0
  %v65 = vsel %vm22, %v60, 0.0
  %v66 = vadd.f32 %v64, %v65
  %67 = vadd.xlane.f32.xlu0 %v66
  %v68 = vpop.xlane.xlu0 %67
  %v69 = vsel %vm22, %v57, 0.0
  %v70 = vsel %vm22, %v61, 0.0
  %v71 = vadd.f32 %v69, %v70
  %72 = vadd.xlane.f32.xlu0 %v71
  %v73 = vpop.xlane.xlu0 %72
  %v74 = vmul.f32 %v68, 0.003921569
  %v75 = vmul.f32 %v73, 0.003921569
  %v76 = vadd.f32 %v74, 1e-06
  %v77 = vadd.f32 %v75, 1e-06
  %v78 = vrsqrt.pop %v76
  %v79 = vmul.f32 %v76, %v78
  %vm80 = vcmp.eq.f32.partialorder %v76, inf
  %v81 = vsel %vm80, %v76, %v79
  %vm82 = vcmp.eq.f32.partialorder %v76, 0.0
  %v83 = vand.u32 %v76, 2147483648
  %v84 = vsel %vm82, %v83, %v81
  %v85 = vrsqrt.pop %v77
  %v86 = vmul.f32 %v77, %v85
  %vm87 = vcmp.eq.f32.partialorder %v77, inf
  %v88 = vsel %vm87, %v77, %v86
  %vm89 = vcmp.eq.f32.partialorder %v77, 0.0
  %v90 = vand.u32 %v77, 2147483648
  %v91 = vsel %vm89, %v90, %v88
  %v92 = vsel %vm22, %v34, 0.0
  %v93 = vsel %vm22, %v35, 0.0
  %v94 = vadd.f32 %v92, %v93
  %v95 = vrcp.pop 2.0
  %v96 = vmul.f32 %v94, %v95
  %v97 = vsub.f32 %v34, %v96
  %v98 = vsub.f32 %v35, %v96
  %v99 = vmul.f32 %v97, %v97
  %v100 = vmul.f32 %v98, %v98
  %v101 = vsel %vm22, %v99, 0.0
  %v102 = vsel %vm22, %v100, 0.0
  %v103 = vadd.f32 %v101, %v102
  %v104 = vadd.f32 %v103, 1e-06
  %v105 = vrsqrt.pop %v104
  %v106 = vmul.f32 %v104, %v105
  %vm107 = vcmp.eq.f32.partialorder %v104, inf
  %v108 = vsel %vm107, %v104, %v106
  %vm109 = vcmp.eq.f32.partialorder %v104, 0.0
  %v110 = vand.u32 %v104, 2147483648
  %v111 = vsel %vm109, %v110, %v108
  %v112 = vsel %vm22, %v84, 0.0
  %v113 = vsel %vm22, %v91, 0.0
  %v114 = vadd.f32 %v112, %v113
  %v115 = vmul.f32 %v114, %v95
  %v116 = vsub.f32 %v84, %v115
  %v117 = vsub.f32 %v91, %v115
  %v118 = vmul.f32 %v116, %v116
  %v119 = vmul.f32 %v117, %v117
  %v120 = vsel %vm22, %v118, 0.0
  %v121 = vsel %vm22, %v119, 0.0
  %v122 = vadd.f32 %v120, %v121
  %v123 = vadd.f32 %v122, 1e-06
  %v124 = vrsqrt.pop %v123
  %v125 = vmul.f32 %v123, %v124
  %vm126 = vcmp.eq.f32.partialorder %v123, inf
  %v127 = vsel %vm126, %v123, %v125
  %vm128 = vcmp.eq.f32.partialorder %v123, 0.0
  %v129 = vand.u32 %v123, 2147483648
  %v130 = vsel %vm128, %v129, %v127
  %v131 = vld [vmem:[%s1] sm:$0xf]
  %v132 = vld [vmem:[%s1 + $0x4] sm:$0xf]
  %v133 = vmul.f32 %v111, 4.0
  %v134 = vmul.f32 %v131, %v133
  %v135 = vmul.f32 %v132, %v133
  %v136 = vadd.f32 %v34, %v134
  %v137 = vadd.f32 %v35, %v135
  %v138 = vld [vmem:[%s2] sm:$0xf]
  %v139 = vld [vmem:[%s2 + $0x4] sm:$0xf]
  %v140 = vmul.f32 %v130, 4.0
  %v141 = vmul.f32 %v138, %v140
  %v142 = vmul.f32 %v139, %v140
  %v143 = vadd.f32 %v84, %v141
  %v144 = vadd.f32 %v91, %v142
  %v145 = vrcp.pop %v84
  %v146 = vmul.f32 %v143, %v145
  %v147 = vrcp.pop %v91
  %v148 = vmul.f32 %v144, %v147
  %v149 = vmul.f32 %v34, %v146
  %v150 = vmul.f32 %v35, %v148
  %v151 = vsub.f32 %v136, %v149
  %v152 = vsub.f32 %v137, %v150
  %154 = vset.pattern.permute.xlu0 0
  %155 = vperm.xlu0 %154, %v146
  %v156 = vpop.permute.xlu0 %155
  %158 = vset.pattern.permute.xlu0 0
  %159 = vperm.xlu0 %158, %v148
  %v160 = vpop.permute.xlu0 %159
  %v162 = vunpack.c.l.s4 839922192
  %v163 = vunpack.c.0.s8 %v162
  %v164 = vlaneseq
  %v165 = vshrl.u32 %v164, 7
  %v166 = vsub.s32 %v163, %v165
  %v167 = vrot.slane %v156, %v166
  %v169 = vunpack.c.l.s4 839922192
  %v170 = vunpack.c.0.s8 %v169
  %v171 = vlaneseq
  %v172 = vshrl.u32 %v171, 7
  %v173 = vsub.s32 %v170, %v172
  %v174 = vrot.slane %v160, %v173
  %v177 = vmul.f32 %v14, %v167
  %v178 = vmul.f32 %v15, %v174
  %180 = vset.pattern.permute.xlu0 0
  %181 = vperm.xlu0 %180, %v151
  %v182 = vpop.permute.xlu0 %181
  %184 = vset.pattern.permute.xlu0 0
  %185 = vperm.xlu0 %184, %v152
  %v186 = vpop.permute.xlu0 %185
  %v188 = vunpack.c.l.s4 839922192
  %v189 = vunpack.c.0.s8 %v188
  %v190 = vlaneseq
  %v191 = vshrl.u32 %v190, 7
  %v192 = vsub.s32 %v189, %v191
  %v193 = vrot.slane %v182, %v192
  %v195 = vunpack.c.l.s4 839922192
  %v196 = vunpack.c.0.s8 %v195
  %v197 = vlaneseq
  %v198 = vshrl.u32 %v197, 7
  %v199 = vsub.s32 %v196, %v198
  %v200 = vrot.slane %v186, %v199
  %v203 = vadd.f32 %v177, %v193
  %v204 = vadd.f32 %v178, %v200
  %205 = vst [vmem:[%s3] sm:$0xff] %v203
  %206 = vst [vmem:[%s3 + $0x8] sm:$0xff] %v204
  // Predicated region
  $region14: #{branch_1_fun.1} parent=0 // pred_check
    _
  $region15: #{branch_1_fun.1} parent=0 // pred_check_branch
    %208 = sbr.rel (0) target = $region17
  $region16: #{branch_1_fun.1} parent=0 // pred_region
    _
  $region17: #{branch_1_fun.1} parent=0 // pred_fallthru
    _
  // Predicated region
  $region18: #{branch_1_fun.1} parent=0 // pred_check
    _
  $region19: #{branch_1_fun.1} parent=0 // pred_check_branch
    %210 = sbr.rel (0) target = $region21
  $region20: #{branch_1_fun.1} parent=0 // pred_region
    _
  $region21: #{branch_1_fun.1} parent=0 // pred_fallthru
    _

</llo_original>
